<compile_context>
chip_gen: v7x
topology: tpu7x:2x2x1
jax: 0.10.0
libtpu: 0.0.40
codegen_flags: <defaults>
</compile_context>

<pallas_src>
import functools

import numpy as np
import jax
import jax.numpy as jnp
from jax.experimental import pallas as pl
from jax.experimental.pallas import tpu as pltpu

NCOL = 128  # lane-dense packed channel axis (n_ks * C real lanes, rest zero-padded)


def _cnn_kernel(x_ref, w_ref, b_ref, vlen_ref, o_ref, *,
                batch_block, pos_padded, n_ks, channels):
    """Fused im2col conv + in-kernel mask + max pool + bias + tanh + mean.

    x_ref    : (BB*Pp, Kpad)  bf16 im2col windows (batch folded into rows)
    w_ref    : (Kpad, 128)    bf16 packed conv weights (zero rows for shifts >= k)
    b_ref    : (1, 128)       f32 packed biases
    vlen_ref : (1, 128)       i32 valid conv positions per lane (0 for unused lanes)
    o_ref    : (BB, 128)      f32 lane-dense output; lanes [0, C) hold the result
    """
    # One wide MXU matmul covers every kernel size and every shift (bf16 in, f32 acc).
    scores = jnp.dot(x_ref[...], w_ref[...],
                     preferred_element_type=jnp.float32)          # (BB*Pp, 128)
    scores = scores.reshape(batch_block, pos_padded, NCOL)

    # In-kernel validity mask: position-within-batch < per-lane valid length.
    pos = jax.lax.broadcasted_iota(jnp.int32, scores.shape, 1)
    vlen = vlen_ref[...].reshape(1, 1, NCOL)
    scores = jnp.where(pos < vlen, scores, jnp.float32(-1e30))

    # Global max pool over positions (valid before bias+tanh: both monotone per lane).
    m = jnp.max(scores, axis=1)                                   # (BB, 128)
    h = jnp.tanh(m + b_ref[...])                                  # (BB, 128)

    # Mean over kernel sizes: sum of lane rotations; lanes [0, C) hold the answer.
    acc = h
    for j in range(1, n_ks):
        s = j * channels
        acc = acc + jnp.concatenate([h[:, s:], h[:, :s]], axis=-1)
    o_ref[...] = (acc * (1.0 / n_ks)).astype(o_ref.dtype)


def _pick_batch_block(batch, pos_padded, target_rows=2048):
    """Whole-batch blocks; multi-block only when B is sublane-tileable."""
    if batch * pos_padded <= target_rows or batch % 8 != 0:
        return batch
    bb = min(batch, max(8, (target_rows // pos_padded) // 8 * 8))
    while batch % bb:
        bb -= 8
    return max(bb, 8)


def cnn_forward(x, weights, biases, ks):
    """x: (B, L, E); weights[j]: (ks[j], E, C); biases[j]: (C,). Returns (B, C)."""
    B, L, E = x.shape
    C = weights[0].shape[2]
    n_ks = len(ks)
    min_k, max_k = min(ks), max(ks)
    assert L >= max_k, "sequence length must be >= largest conv kernel size"
    assert n_ks * C <= NCOL

    P = L - min_k + 1                       # conv positions evaluated per batch
    Pp = ((P + 7) // 8) * 8                 # sublane-aligned positions per batch
    Kdim = max_k * E                        # im2col contraction length
    Kpad = ((Kdim + 127) // 128) * 128      # lane-aligned contraction length

    # ---- im2col (wrapper-side layout plumbing; windows never cross batches) -------
    xf = x.astype(jnp.float32)
    x_pad = jnp.pad(xf, ((0, 0), (0, P + max_k - 1 - L), (0, 0)))
    win = jnp.stack([x_pad[:, i:i + P, :] for i in range(max_k)], axis=2)  # (B,P,max_k,E)
    win = win.reshape(B, P, Kdim)
    win = jnp.pad(win, ((0, 0), (0, Pp - P), (0, Kpad - Kdim)))
    x_im2col = win.reshape(B * Pp, Kpad).astype(jnp.bfloat16)

    # ---- packed conv weights / bias / valid lengths (lane-dense 128-wide slab) ----
    # Invariant: weight rows for shifts >= k of each kernel-size group stay zero, so
    # the extra window rows of smaller kernels (and the zero pad rows) contribute 0.
    w_big = np.zeros((Kpad, NCOL), np.float32)
    b_big = np.zeros((1, NCOL), np.float32)
    vlen = np.zeros((1, NCOL), np.int32)
    for j, k in enumerate(ks):
        cols = slice(j * C, (j + 1) * C)
        w_big[:k * E, cols] = np.asarray(weights[j], np.float32).reshape(k * E, C)
        b_big[0, cols] = np.asarray(biases[j], np.float32)
        vlen[0, cols] = L - k + 1           # valid conv positions for this kernel size
    w_big = jnp.asarray(w_big, jnp.bfloat16)
    b_big = jnp.asarray(b_big)
    vlen = jnp.asarray(vlen)

    # ---- batch-block grid (whole batches per block so the max never spans blocks) --
    bb = _pick_batch_block(B, Pp)
    # TODO(synk): for very large B*L also tile the position axis with an online max.
    grid = (B // bb,)

    kernel = functools.partial(
        _cnn_kernel, batch_block=bb, pos_padded=Pp, n_ks=n_ks, channels=C)

    out = pl.pallas_call(
        kernel,
        out_shape=jax.ShapeDtypeStruct((B, NCOL), jnp.float32),
        grid=grid,
        in_specs=[
            pl.BlockSpec((bb * Pp, Kpad), lambda i: (i, 0)),
            pl.BlockSpec((Kpad, NCOL), lambda i: (0, 0)),
            pl.BlockSpec((1, NCOL), lambda i: (0, 0)),
            pl.BlockSpec((1, NCOL), lambda i: (0, 0)),
        ],
        out_specs=pl.BlockSpec((bb, NCOL), lambda i: (i, 0)),
        compiler_params=pltpu.CompilerParams(
            dimension_semantics=("parallel",)),
    )(x_im2col, w_big, b_big, vlen)

    return out[:, :C].astype(x.dtype)       # (B, C)


def cnn_reference(x, weights, biases, ks):
    """Pure-JAX f32 reference matching the PyTorch forward."""
    B, L, E = x.shape
    outs = []
    for k, w, bvec in zip(ks, weights, biases):
        Lk = L - k + 1
        C = w.shape[2]
        scores = jnp.zeros((B, Lk, C), jnp.float32)
        for i in range(k):
            scores = scores + jnp.einsum(
                "ble,ec->blc", x[:, i:i + Lk, :].astype(jnp.float32),
                w[i].astype(jnp.float32), preferred_element_type=jnp.float32)
        h = jnp.tanh(scores + bvec[None, None, :])
        outs.append(jnp.max(h, axis=1))                       # max_pool1d over length
    return jnp.mean(jnp.stack(outs, axis=-1), axis=-1)        # cat + mean over sizes


if __name__ == "__main__":
    # Module hyperparameters (forward implies in_channel == 1 due to unsqueeze(1)).
    out_channel = 4
    embed_dim = 32
    kernel_size = "3,4,5"
    ks = [int(i) for i in kernel_size.split(",")]

    B, L, E = 2, 16, embed_dim

    key = jax.random.PRNGKey(0)
    kx, *kws = jax.random.split(key, 1 + 2 * len(ks))

    x = jax.random.normal(kx, (B, L, E), dtype=jnp.float32)

    weights, biases = [], []
    for i, k in enumerate(ks):
        w = 0.1 * jax.random.normal(kws[2 * i], (k, E, out_channel), dtype=jnp.float32)
        b = 0.1 * jax.random.normal(kws[2 * i + 1], (out_channel,), dtype=jnp.float32)
        weights.append(w)
        biases.append(b)

    out = cnn_forward(x, weights, biases, ks)
    out = jax.block_until_ready(out)

    ref = cnn_reference(x, weights, biases, ks)
    assert out.shape == (B, out_channel), out.shape
    # bf16 matmul inputs (f32 accumulation) -> small rounding vs. the f32 reference.
    assert jnp.allclose(out, ref, atol=2e-2, rtol=2e-2), (out, ref)

    print("KERNEL_OK")
</pallas_src>

<mosaic_0001>
module attributes {stable_mosaic.version = 11 : i64} {
  func.func @_cnn_kernel(%arg0: i32, %arg1: memref<32x256xbf16, #tpu.memory_space<vmem>>, %arg2: memref<256x128xbf16, #tpu.memory_space<vmem>>, %arg3: memref<1x128xf32, #tpu.memory_space<vmem>>, %arg4: memref<1x128xi32, #tpu.memory_space<vmem>>, %arg5: memref<2x128xf32, #tpu.memory_space<vmem>>) attributes {dimension_semantics = [#tpu.dimension_semantics<parallel>], iteration_bounds = array<i64: 1>, scalar_prefetch = 0 : i64, scratch_operands = 0 : i64, tpu.core_type = #tpu.core_type<tc>, window_params = [{transform_indices = @transform_0, window_bounds = array<i64: 32, 256>}, {pipeline_mode = #tpu.pipeline_mode<synchronous>, transform_indices = @transform_1, window_bounds = array<i64: 256, 128>}, {pipeline_mode = #tpu.pipeline_mode<synchronous>, transform_indices = @transform_2, window_bounds = array<i64: 1, 128>}, {pipeline_mode = #tpu.pipeline_mode<synchronous>, transform_indices = @transform_3, window_bounds = array<i64: 1, 128>}, {transform_indices = @transform_4, window_bounds = array<i64: 2, 128>}]} {
    %c0 = arith.constant 0 : index
    %c0_0 = arith.constant 0 : index
    %0 = vector.load %arg1[%c0, %c0_0] : memref<32x256xbf16, #tpu.memory_space<vmem>>, vector<32x256xbf16>
    %c0_1 = arith.constant 0 : index
    %c0_2 = arith.constant 0 : index
    %1 = vector.load %arg2[%c0_1, %c0_2] : memref<256x128xbf16, #tpu.memory_space<vmem>>, vector<256x128xbf16>
    %cst = arith.constant dense<0.000000e+00> : vector<32x128xf32>
    %2 = tpu.matmul %0, %1, %cst {dimension_numbers = #tpu.dot_dimension_numbers<[1], [0], [0], [1], [0, 0, 1, 1], [], []>} : vector<32x256xbf16>, vector<256x128xbf16>, vector<32x128xf32> -> vector<32x128xf32>
    %3 = vector.shape_cast %2 : vector<32x128xf32> to vector<2x16x128xf32>
    %4 = tpu.iota {dimensions = array<i32: 1>} : vector<2x16x128xi32>
    %c0_3 = arith.constant 0 : index
    %c0_4 = arith.constant 0 : index
    %5 = vector.load %arg4[%c0_3, %c0_4] : memref<1x128xi32, #tpu.memory_space<vmem>>, vector<1x128xi32>
    %6 = vector.shape_cast %5 : vector<1x128xi32> to vector<1x1x128xi32>
    %7 = vector.broadcast %6 : vector<1x1x128xi32> to vector<2x16x128xi32>
    %8 = arith.cmpi slt, %4, %7 : vector<2x16x128xi32>
    %cst_5 = arith.constant -1.000000e+30 : f32
    %9 = vector.broadcast %cst_5 : f32 to vector<2x16x128xf32>
    %10 = arith.select %8, %3, %9 : vector<2x16x128xi1>, vector<2x16x128xf32>
    %cst_6 = arith.constant dense<0xFF800000> : vector<2x128xf32>
    %11 = vector.multi_reduction <maximumf>, %10, %cst_6 [1] : vector<2x16x128xf32> to vector<2x128xf32>
    %c0_7 = arith.constant 0 : index
    %c0_8 = arith.constant 0 : index
    %12 = vector.load %arg3[%c0_7, %c0_8] : memref<1x128xf32, #tpu.memory_space<vmem>>, vector<1x128xf32>
    %13 = vector.broadcast %12 : vector<1x128xf32> to vector<2x128xf32>
    %14 = arith.addf %11, %13 : vector<2x128xf32>
    %15 = math.tanh %14 : vector<2x128xf32>
    %16 = vector.extract_strided_slice %15 {offsets = [0, 4], sizes = [2, 124], strides = [1, 1]} : vector<2x128xf32> to vector<2x124xf32>
    %17 = vector.extract_strided_slice %15 {offsets = [0, 0], sizes = [2, 4], strides = [1, 1]} : vector<2x128xf32> to vector<2x4xf32>
    %18 = tpu.concatenate %16, %17 in 1 : vector<2x124xf32>, vector<2x4xf32> -> vector<2x128xf32>
    %19 = arith.addf %15, %18 : vector<2x128xf32>
    %20 = vector.extract_strided_slice %15 {offsets = [0, 8], sizes = [2, 120], strides = [1, 1]} : vector<2x128xf32> to vector<2x120xf32>
    %21 = vector.extract_strided_slice %15 {offsets = [0, 0], sizes = [2, 8], strides = [1, 1]} : vector<2x128xf32> to vector<2x8xf32>
    %22 = tpu.concatenate %20, %21 in 1 : vector<2x120xf32>, vector<2x8xf32> -> vector<2x128xf32>
    %23 = arith.addf %19, %22 : vector<2x128xf32>
    %cst_9 = arith.constant 0.333333343 : f32
    %24 = vector.broadcast %cst_9 : f32 to vector<2x128xf32>
    %25 = arith.mulf %23, %24 : vector<2x128xf32>
    %c0_10 = arith.constant 0 : index
    %c0_11 = arith.constant 0 : index
    %26 = vector.load %arg5[%c0_10, %c0_11] : memref<2x128xf32, #tpu.memory_space<vmem>>, vector<2x128xf32>
    tpu.vector_store %arg5[%c0_10, %c0_11], %25 {strides = array<i32>} : memref<2x128xf32, #tpu.memory_space<vmem>>, vector<2x128xf32>,
    return
  }
  func.func @transform_0(%arg0: i32) -> (i32, i32) {
    %c0_i32 = arith.constant 0 : i32
    %c0_i32_0 = arith.constant 0 : i32
    return %arg0, %c0_i32 : i32, i32
  }
  func.func @transform_1(%arg0: i32) -> (i32, i32) {
    %c0_i32 = arith.constant 0 : i32
    %c0_i32_0 = arith.constant 0 : i32
    %c0_i32_1 = arith.constant 0 : i32
    return %c0_i32, %c0_i32_0 : i32, i32
  }
  func.func @transform_2(%arg0: i32) -> (i32, i32) {
    %c0_i32 = arith.constant 0 : i32
    %c0_i32_0 = arith.constant 0 : i32
    %c0_i32_1 = arith.constant 0 : i32
    return %c0_i32, %c0_i32_0 : i32, i32
  }
  func.func @transform_3(%arg0: i32) -> (i32, i32) {
    %c0_i32 = arith.constant 0 : i32
    %c0_i32_0 = arith.constant 0 : i32
    %c0_i32_1 = arith.constant 0 : i32
    return %c0_i32, %c0_i32_0 : i32, i32
  }
  func.func @transform_4(%arg0: i32) -> (i32, i32) {
    %c0_i32 = arith.constant 0 : i32
    %c0_i32_0 = arith.constant 0 : i32
    return %arg0, %c0_i32 : i32, i32
  }
}

</mosaic_0001>

<llo_original>
// kernel: tpu_custom_call.1
$region0: #{tpu_custom_call.1}
  #allocation0 [shape = 'u32[]', space=smem, size = 0x4, offset = 0x4, fixed_abs, tag = 'smem constant byte address 0x4 - core index']
  #allocation1 [shape = 'u32[144,128]{1,0:T(1,128)}', space=vmem, size = 0x12000, scoped, tag = 'internal scratch']
  %s0 = inlined_call_operand.hbm [shape: bf16[32,256], index: 0, kind: input, shape index: {}]
  %s1 = inlined_call_operand.hbm [shape: bf16[256,128], index: 1, kind: input, shape index: {}]
  %s2 = inlined_call_operand.vmem [shape: f32[1,128], index: 2, kind: input, shape index: {}]
  %s3 = inlined_call_operand.vmem [shape: s32[1,128], index: 3, kind: input, shape index: {}]
  %s4 = inlined_call_operand.hbm [shape: f32[2,128], index: 4, kind: output, shape index: {}]
  %s5 = sld [smem:[#allocation0]]
  $region34: #{tpu_custom_call.1} parent=0
    _
  %s7 = ssub.s32 1, %s5
  %s8 = scalar_select 0, %s7, %s5
  $region1: #{tpu_custom_call.1} parent=0
    #allocation2 [shape = 'u8[16384]{0}', space=vmem, size = 0x4000, scoped, tag = 'input window, operand 0, single buffered']
    #allocation3 [shape = 's32[1]{0}', space=sflag, size = 0x4, scoped, tag = 'scoped memory for tpu_custom_call.1']
    #allocation4 [shape = 's32[1]{0}', space=sflag, size = 0x4, scoped, tag = 'scoped memory for tpu_custom_call.1']
    #allocation5 [shape = 'u8[65536]{0}', space=vmem, size = 0x10000, scoped, tag = 'input window, operand 1, single buffered']
    #allocation6 [shape = 's32[1]{0}', space=sflag, size = 0x4, scoped, tag = 'scoped memory for tpu_custom_call.1']
    #allocation7 [shape = 'u8[1024]{0}', space=vmem, size = 0x400, scoped, tag = 'output window, operand 0, single buffered']
    %9 = vsyncpa [#allocation3], 0
    %10 = vsyncpa [#allocation6], 0
    %11 = vsyncpa [#allocation4], 0
    // Predicated region
    $region2: #{tpu_custom_call.1} parent=1 // pred_check
      _
    $region3: #{tpu_custom_call.1} parent=1 // pred_check_branch
      %13 = sbr.rel (0) target = $region5
    $region4: #{tpu_custom_call.1} parent=1 // pred_region
      %s15 = ssub.s32 512, 512
      %16 = vsyncadd [#allocation3], %s15
      %s17 = sshll.u32 [#allocation2], 4
      %s18 = int_to_ptr.vmem [resolvable:$true] %s17
      %23 = dma.hbm_to_vmem [thread:$0]  %s0, 512, %s18, [#allocation3], 128, 128, 8
    $region5: #{tpu_custom_call.1} parent=1 // pred_fallthru
      _
    // Predicated region
    $region6: #{tpu_custom_call.1} parent=1 // pred_check
      _
    $region7: #{tpu_custom_call.1} parent=1 // pred_check_branch
      %25 = sbr.rel (0) target = $region9
    $region8: #{tpu_custom_call.1} parent=1 // pred_region
      %s27 = ssub.s32 2048, 2048
      %28 = vsyncadd [#allocation6], %s27
      %s29 = sshll.u32 [#allocation5], 4
      %s30 = int_to_ptr.vmem [resolvable:$true] %s29
      %35 = dma.hbm_to_vmem [thread:$0]  %s1, 2048, %s30, [#allocation6], 64, 64, 4
    $region9: #{tpu_custom_call.1} parent=1 // pred_fallthru
      _
    // Predicated region
    $region10: #{tpu_custom_call.1} parent=1 // pred_check
      _
    $region11: #{tpu_custom_call.1} parent=1 // pred_check_branch
      %37 = sbr.rel (0) target = $region13
    $region12: #{tpu_custom_call.1} parent=1 // pred_region
      _
    $region13: #{tpu_custom_call.1} parent=1 // pred_fallthru
      _
    // Predicated region
    $region14: #{tpu_custom_call.1} parent=1 // pred_check
      _
    $region15: #{tpu_custom_call.1} parent=1 // pred_check_branch
      %39 = sbr.rel (0) target = $region17
    $region16: #{tpu_custom_call.1} parent=1 // pred_region
      _
    $region17: #{tpu_custom_call.1} parent=1 // pred_fallthru
      _
    // Predicated region
    $region18: #{tpu_custom_call.1} parent=1 // pred_check
      _
    $region19: #{tpu_custom_call.1} parent=1 // pred_check_branch
      %41 = sbr.rel (0) target = $region21
    $region20: #{tpu_custom_call.1} parent=1 // pred_region
      %42 = dma.done [#allocation3], 512
    $region21: #{tpu_custom_call.1} parent=1 // pred_fallthru
      _
    // Predicated region
    $region22: #{tpu_custom_call.1} parent=1 // pred_check
      _
    $region23: #{tpu_custom_call.1} parent=1 // pred_check_branch
      %44 = sbr.rel (0) target = $region25
    $region24: #{tpu_custom_call.1} parent=1 // pred_region
      %45 = dma.done [#allocation6], 2048
    $region25: #{tpu_custom_call.1} parent=1 // pred_fallthru
      _
    %v47 = vld [vmem:[#allocation2] sm:$0xff]
    %v48 = vld [vmem:[#allocation2 + $0x8] sm:$0xff]
    %v49 = vld [vmem:[#allocation2 + $0x10] sm:$0xff]
    %v50 = vld [vmem:[#allocation2 + $0x18] sm:$0xff]
    %v51 = vld [vmem:[#allocation5] sm:$0xf]
    %v52 = vld [vmem:[#allocation5 + $0x4] sm:$0xf]
    %v53 = vld [vmem:[#allocation5 + $0x8] sm:$0xf]
    %v54 = vld [vmem:[#allocation5 + $0xc] sm:$0xf]
    %v55 = vld [vmem:[#allocation5 + $0x10] sm:$0xf]
    %v56 = vld [vmem:[#allocation5 + $0x14] sm:$0xf]
    %v57 = vld [vmem:[#allocation5 + $0x18] sm:$0xf]
    %v58 = vld [vmem:[#allocation5 + $0x1c] sm:$0xf]
    %v59 = vld [vmem:[#allocation5 + $0x20] sm:$0xf]
    %v60 = vld [vmem:[#allocation5 + $0x24] sm:$0xf]
    %v61 = vld [vmem:[#allocation5 + $0x28] sm:$0xf]
    %v62 = vld [vmem:[#allocation5 + $0x2c] sm:$0xf]
    %v63 = vld [vmem:[#allocation5 + $0x30] sm:$0xf]
    %v64 = vld [vmem:[#allocation5 + $0x34] sm:$0xf]
    %v65 = vld [vmem:[#allocation5 + $0x38] sm:$0xf]
    %v66 = vld [vmem:[#allocation5 + $0x3c] sm:$0xf]
    %v67 = vld [vmem:[#allocation5 + $0x40] sm:$0xf]
    %v68 = vld [vmem:[#allocation5 + $0x44] sm:$0xf]
    %v69 = vld [vmem:[#allocation5 + $0x48] sm:$0xf]
    %v70 = vld [vmem:[#allocation5 + $0x4c] sm:$0xf]
    %v71 = vld [vmem:[#allocation5 + $0x50] sm:$0xf]
    %v72 = vld [vmem:[#allocation5 + $0x54] sm:$0xf]
    %v73 = vld [vmem:[#allocation5 + $0x58] sm:$0xf]
    %v74 = vld [vmem:[#allocation5 + $0x5c] sm:$0xf]
    %v75 = vld [vmem:[#allocation5 + $0x60] sm:$0xf]
    %v76 = vld [vmem:[#allocation5 + $0x64] sm:$0xf]
    %v77 = vld [vmem:[#allocation5 + $0x68] sm:$0xf]
    %v78 = vld [vmem:[#allocation5 + $0x6c] sm:$0xf]
    %v79 = vld [vmem:[#allocation5 + $0x70] sm:$0xf]
    %v80 = vld [vmem:[#allocation5 + $0x74] sm:$0xf]
    %v81 = vld [vmem:[#allocation5 + $0x78] sm:$0xf]
    %v82 = vld [vmem:[#allocation5 + $0x7c] sm:$0xf]
    %v87 = vunpack.c.l.b16 %v47
    %v88 = vunpack.c.h.b16 %v47
    %v89 = vunpack.c.l.b16 %v48
    %v90 = vunpack.c.h.b16 %v48
    %v91 = vunpack.c.l.b16 %v49
    %v92 = vunpack.c.h.b16 %v49
    %v93 = vunpack.c.l.b16 %v50
    %v94 = vunpack.c.h.b16 %v50
    %v95 = vpack.c.b16 %v89, %v87
    %v96 = vpack.c.b16 %v90, %v88
    %v97 = vpack.c.b16 %v93, %v91
    %v98 = vpack.c.b16 %v94, %v92
    %v135 = vunpack.c.l.b16 %v51
    %v136 = vunpack.c.l.b16 %v52
    %v137 = vunpack.c.l.b16 %v53
    %v138 = vunpack.c.l.b16 %v54
    %v139 = vunpack.c.l.b16 %v55
    %v140 = vunpack.c.l.b16 %v56
    %v141 = vunpack.c.l.b16 %v57
    %v142 = vunpack.c.l.b16 %v58
    %v143 = vunpack.c.l.b16 %v59
    %v144 = vunpack.c.l.b16 %v60
    %v145 = vunpack.c.l.b16 %v61
    %v146 = vunpack.c.l.b16 %v62
    %v147 = vunpack.c.l.b16 %v63
    %v148 = vunpack.c.l.b16 %v64
    %v149 = vunpack.c.l.b16 %v65
    %v150 = vunpack.c.l.b16 %v66
    %v151 = vunpack.c.l.b16 %v67
    %v152 = vunpack.c.l.b16 %v68
    %v153 = vunpack.c.l.b16 %v69
    %v154 = vunpack.c.l.b16 %v70
    %v155 = vunpack.c.l.b16 %v71
    %v156 = vunpack.c.l.b16 %v72
    %v157 = vunpack.c.l.b16 %v73
    %v158 = vunpack.c.l.b16 %v74
    %v159 = vunpack.c.l.b16 %v75
    %v160 = vunpack.c.l.b16 %v76
    %v161 = vunpack.c.l.b16 %v77
    %v162 = vunpack.c.l.b16 %v78
    %v163 = vunpack.c.l.b16 %v79
    %v164 = vunpack.c.l.b16 %v80
    %v165 = vunpack.c.l.b16 %v81
    %v166 = vunpack.c.l.b16 %v82
    %v167 = vpack.c.b16 %v136, %v135
    %v168 = vpack.c.b16 %v138, %v137
    %v169 = vpack.c.b16 %v140, %v139
    %v170 = vpack.c.b16 %v142, %v141
    %v171 = vpack.c.b16 %v144, %v143
    %v172 = vpack.c.b16 %v146, %v145
    %v173 = vpack.c.b16 %v148, %v147
    %v174 = vpack.c.b16 %v150, %v149
    %v175 = vpack.c.b16 %v152, %v151
    %v176 = vpack.c.b16 %v154, %v153
    %v177 = vpack.c.b16 %v156, %v155
    %v178 = vpack.c.b16 %v158, %v157
    %v179 = vpack.c.b16 %v160, %v159
    %v180 = vpack.c.b16 %v162, %v161
    %v181 = vpack.c.b16 %v164, %v163
    %v182 = vpack.c.b16 %v166, %v165
    %199 = vmatprep.subr.bf16.mxu0 0
    %200 = vmatpush1.bf16.msra.mxu0 %v167
    %201 = vmatprep.subr.bf16.mxu0 0
    %202 = vmatpush1.bf16.msra.mxu0 %v168
    %203 = vmatprep.subr.bf16.mxu0 0
    %204 = vmatpush1.bf16.msra.mxu0 %v169
    %205 = vmatprep.subr.bf16.mxu0 0
    %206 = vmatpush1.bf16.msra.mxu0 %v170
    %207 = vmatprep.subr.bf16.mxu0 0
    %208 = vmatpush1.bf16.msra.mxu0 %v171
    %209 = vmatprep.subr.bf16.mxu0 0
    %210 = vmatpush1.bf16.msra.mxu0 %v172
    %211 = vmatprep.subr.bf16.mxu0 0
    %212 = vmatpush1.bf16.msra.mxu0 %v173
    %213 = vmatprep.subr.bf16.mxu0 0
    %214 = vmatpush1.bf16.msra.mxu0 %v174
    %215 = vmatprep.subr.bf16.mxu0 0
    %216 = vmatpush1.bf16.msra.mxu0 %v175
    %217 = vmatprep.subr.bf16.mxu0 0
    %218 = vmatpush1.bf16.msra.mxu0 %v176
    %219 = vmatprep.subr.bf16.mxu0 0
    %220 = vmatpush1.bf16.msra.mxu0 %v177
    %221 = vmatprep.subr.bf16.mxu0 0
    %222 = vmatpush1.bf16.msra.mxu0 %v178
    %223 = vmatprep.subr.bf16.mxu0 0
    %224 = vmatpush1.bf16.msra.mxu0 %v179
    %225 = vmatprep.subr.bf16.mxu0 0
    %226 = vmatpush1.bf16.msra.mxu0 %v180
    %227 = vmatprep.subr.bf16.mxu0 0
    %228 = vmatpush1.bf16.msra.mxu0 %v181
    %229 = vmatprep.subr.bf16.mxu0 0
    %230 = vmatpush1.bf16.msra.mxu0 %v182
    %231 = vmatprep.mubr.bf16.mxu0 %v96
    %232 = vmatmul.mubr.bf16.gmra.mrb[0].mxu0 %v95
    %v233 = vpop.f32.mrb[0].mxu0
    %v234 = vadd.f32 0.0, %v233
    %v235 = vpop.f32.mrb[0].mxu0
    %v236 = vpop.f32.mrb[0].mxu0
    %v237 = vadd.f32 0.0, %v236
    %v238 = vpop.f32.mrb[0].mxu0
    %239 = vmatprep.mubr.bf16.mxu0 %v98
    %240 = vmatmul.mubr.bf16.gmra.mrb[0].mxu0 %v97
    %v241 = vpop.f32.mrb[0].mxu0
    %v242 = vadd.f32 0.0, %v241
    %v243 = vpop.f32.mrb[0].mxu0
    %v244 = vpop.f32.mrb[0].mxu0
    %v245 = vadd.f32 0.0, %v244
    %v246 = vpop.f32.mrb[0].mxu0
    %247 = vdwg.mxu0
    %v248 = vlaneseq
    %v249 = vshrl.u32 %v248, 7
    %v250 = vadd.s32 %v249, 8
    %v251 = vld [vmem:[%s3] sm:$0x1]
    %v252 = vlaneseq
    %v253 = vshrl.u32 %v252, 7
    %v254 = vsub.s32 0, %v253
    %v255 = vrot.slane %v251, %v254
    %vm256 = vcmp.lt.s32.totalorder %v249, %v255
    %vm257 = vcmp.lt.s32.totalorder %v250, %v255
    %v258 = vsel %vm256, %v234, -1e+30
    %v259 = vsel %vm257, %v237, -1e+30
    %v260 = vsel %vm256, %v242, -1e+30
    %v261 = vsel %vm257, %v245, -1e+30
    %v262 = vmax.f32 %v258, %v259
    %v263 = vrot.slane %v262, 4
    %v264 = vmax.f32 %v262, %v263
    %v265 = vrot.slane %v264, 2
    %v266 = vmax.f32 %v264, %v265
    %v267 = vrot.slane %v266, 1
    %v268 = vmax.f32 %v266, %v267
    %v269 = vmax.f32 %v260, %v261
    %v270 = vrot.slane %v269, 4
    %v271 = vmax.f32 %v269, %v270
    %v272 = vrot.slane %v271, 2
    %v273 = vmax.f32 %v271, %v272
    %v274 = vrot.slane %v273, 1
    %v275 = vmax.f32 %v273, %v274
    %v276 = vld [vmem:[%s2] sm:$0x1]
    %v278 = vlaneseq
    %v279 = vshrl.u32 %v278, 7
    %v280 = vsub.s32 0, %v279
    %v281 = vrot.slane %v276, %v280
    %v283 = vadd.f32 %v268, %v281
    %v284 = vadd.f32 %v275, %v281
    %v285 = vtanh.pop %v283
    %v286 = vtanh.pop %v284
    %v289 = vrot.slane %v286, 7
    %vm290 = vcmask 1041409
    %v291 = vsel %vm290, %v289, %v285
    %292 = vrot.lane.b32.xlu0 %v291, 124
    %v293 = vpop.permute.xlu0 %292
    %v296 = vrot.slane %v293, 1
    %v299 = vadd.f32 %v285, %v293
    %v300 = vadd.f32 %v286, %v296
    %301 = vrot.lane.b32.xlu0 %v291, 120
    %v302 = vpop.permute.xlu0 %301
    %v305 = vrot.slane %v302, 1
    %v308 = vadd.f32 %v299, %v302
    %v309 = vadd.f32 %v300, %v305
    %v310 = vmul.f32 %v308, 0.33333334
    %v311 = vmul.f32 %v309, 0.33333334
    %v314 = vrot.slane %v311, 7
    %v315 = vsel %vm290, %v314, %v310
    %317 = vst [vmem:[#allocation7] sm:$0x3] %v315
    // Predicated region
    $region26: #{tpu_custom_call.1} parent=1 // pred_check
      _
    $region27: #{tpu_custom_call.1} parent=1 // pred_check_branch
      %319 = sbr.rel (0) target = $region29
    $region28: #{tpu_custom_call.1} parent=1 // pred_region
      %s321 = ssub.s32 32, 32
      %322 = vsyncadd [#allocation4], %s321
      %s324 = sshll.u32 [#allocation7], 4
      %s325 = int_to_ptr.vmem [resolvable:$true] %s324
      %327 = dma.vmem_to_hbm [thread:$0]  %s325, 32, %s4, [#allocation4]
    $region29: #{tpu_custom_call.1} parent=1 // pred_fallthru
      _
    // Predicated region
    $region30: #{tpu_custom_call.1} parent=1 // pred_check
      _
    $region31: #{tpu_custom_call.1} parent=1 // pred_check_branch
      %329 = sbr.rel (0) target = $region33
    $region32: #{tpu_custom_call.1} parent=1 // pred_region
      %330 = dma.done [#allocation4], 32
    $region33: #{tpu_custom_call.1} parent=1 // pred_fallthru
      _
    %331 = vsyncpa [#allocation3], 1
    %332 = vsyncpa [#allocation6], 1
    %333 = vsyncpa [#allocation4], 1

</llo_original>
